<compile_context>
chip_gen: v6e
topology: v6e:2x2x1
jax: 0.10.0
libtpu: 0.0.40
codegen_flags: <defaults>
</compile_context>

<pallas_src>
import functools

import jax
import jax.numpy as jnp
from jax.experimental import pallas as pl
from jax.experimental.pallas import tpu as pltpu


def _round_up(n, m):
    return ((n + m - 1) // m) * m


def _choose_batch_tile(batch):
    """Rows per grid step.

    * multiple of 128 (lane width) so the transposed output row is lane-dense
    * capped at 2048 rows (double-buffered tiles stay a few MiB -> v7x-safe)
    * >= 2 grid steps whenever the batch spans >= 2 chunks of 128 rows so both
      v7x TensorCores get work
    * minimise padded (wasted) rows, trading against per-step overhead
      (~0.35us ~ half a 128-row chunk of work for this tiny MLP); prefer even
      step counts, then fewer steps.
    """
    chunks = pl.cdiv(max(batch, 1), 128)
    cap_chunks = 16                            # 2048-row tile cap
    if chunks <= 1:
        return 128
    best_key, best_tb = None, None
    for tb_c in range(1, min(cap_chunks, chunks) + 1):
        steps = pl.cdiv(chunks, tb_c)
        if steps < 2:                          # keep both v7x TCs busy
            continue
        pad = tb_c * steps - chunks            # wasted 128-row chunks
        cost = pad + 0.5 * steps               # step overhead ~ half a chunk
        key = (cost, steps % 2, steps)
        if best_key is None or key < best_key:
            best_key, best_tb = key, tb_c
    return best_tb * 128


def mlp_kernel(x_ref, w1_ref, b1_ref, w2_ref, b2_ref, w3_ref, b3_ref, o_ref,
               *, fc3_on_mxu):
    # x_ref: (in_dim, tb) -- already transposed + cast in the wrapper, so x
    # loads are lane-dense (batch on lanes) and fc1 is a canonical MXU dot.
    cdt = w1_ref.dtype

    # fc1: (hid1, in) @ (in, tb) -> (hid1, tb), f32 accumulation on the MXU.
    h1 = jax.lax.dot_general(w1_ref[...], x_ref[...],
                             (((1,), (0,)), ((), ())),
                             preferred_element_type=jnp.float32)
    # Bias + ReLU fused in the compute dtype (bf16 on v6e/v7x halves the VALU
    # work) -- h1 is then directly the fc2 MXU input, no separate cast pass.
    h1 = jnp.maximum(h1.astype(cdt) + b1_ref[...], 0.0)

    # fc2: (hid2, hid1) @ (hid1, tb) -> (hid2, tb), f32 accumulation.
    h2 = jax.lax.dot_general(w2_ref[...], h1,
                             (((1,), (0,)), ((), ())),
                             preferred_element_type=jnp.float32)
    h2 = jnp.maximum(h2 + b2_ref[...], 0.0)          # small (64, tb): keep f32

    out_dim = o_ref.shape[0]
    if fc3_on_mxu:
        # out_dim large enough to amortise one small MXU pass:
        # (out_dim, hid2) @ (hid2, tb) -> (out_dim, tb)
        out = jax.lax.dot_general(w3_ref[...], h2,
                                  (((1,), (0,)), ((), ())),
                                  preferred_element_type=jnp.float32)
        out = out + b3_ref[...]
    else:
        # Tiny out_dim (default 1): keep fc3 OFF the MXU.  Broadcast multiply
        # (VPU) + sublane-axis reduce (XLU) yields the lane-dense result.
        w3 = w3_ref[...]                               # (hid2, out_dim), f32
        rows = []
        for o in range(out_dim):                       # static, tiny unroll
            r = jnp.sum(h2 * w3[:, o:o + 1], axis=0, keepdims=True)  # (1, tb)
            rows.append(r + b3_ref[o:o + 1, :])
        out = rows[0] if out_dim == 1 else jnp.concatenate(rows, axis=0)

    o_ref[...] = out.astype(o_ref.dtype)


def custom_model_tsf_forward(x, params, *, batch_tile=None,
                             compute_dtype=jnp.bfloat16):
    """Forward pass of CustomModelTSF.

    x: (B, input_dim) float32
    params (PyTorch layout): w1 (256, in), b1 (256,), w2 (64, 256), b2 (64,),
                             w3 (out_dim, 64), b3 (out_dim,)
    compute_dtype: dtype for the two big MXU matmuls (bf16-native on
                   v5e/v6e/v7x; accumulation stays f32).
    """
    B, in_dim = x.shape
    w1, b1 = params["w1"], params["b1"]
    w2, b2 = params["w2"], params["b2"]
    w3, b3 = params["w3"], params["b3"]
    hid1, hid2 = w1.shape[0], w2.shape[0]
    out_dim = w3.shape[0]

    tb = batch_tile if batch_tile is not None else _choose_batch_tile(B)
    assert tb % 128 == 0, "batch tile must be a multiple of 128 (lane width)"
    B_pad = _round_up(B, tb)
    grid = (B_pad // tb,)

    # Pad + transpose + cast x in the wrapper: kernel sees a lane-dense
    # (in_dim, tb) tile already in the compute dtype.
    xt = x
    if B_pad != B:
        xt = jnp.pad(xt, ((0, B_pad - B), (0, 0)))
    xt = xt.astype(compute_dtype).T                       # (in_dim, B_pad)

    fc3_on_mxu = out_dim >= 8
    w1c = w1.astype(compute_dtype)
    w2c = w2.astype(compute_dtype)
    b1c = b1.reshape(hid1, 1).astype(compute_dtype)       # fused bf16 epilogue
    b2c = b2.reshape(hid2, 1).astype(jnp.float32)
    w3c = (w3 if fc3_on_mxu else w3.T).astype(jnp.float32)
    b3c = b3.reshape(out_dim, 1).astype(jnp.float32)
    w3_shape = (out_dim, hid2) if fc3_on_mxu else (hid2, out_dim)

    full = lambda shape: pl.BlockSpec(shape, lambda i: (0,) * len(shape))

    cbytes = jnp.dtype(compute_dtype).itemsize
    flops = 2 * B_pad * (in_dim * hid1 + hid1 * hid2 + hid2 * out_dim)
    bytes_accessed = int(
        B_pad * in_dim * cbytes                      # x in
        + B_pad * out_dim * 4                        # out
        + (hid1 * in_dim + hid2 * hid1 + hid1) * cbytes   # w1, w2, b1
        + (hid2 + hid2 * out_dim + out_dim) * 4)          # b2, w3, b3

    # VMEM budget from actual tile arithmetic, ~2x headroom, clamped 16-32 MiB
    # (don't hand the compiler all of v7x's 64 MiB physical VMEM).
    vmem_est = (2 * in_dim * tb * cbytes             # x tile, double-buffered
                + 2 * out_dim * tb * 4               # out tile, double-buffered
                + 2 * (hid1 * in_dim + hid2 * hid1 + hid1) * cbytes
                + 2 * (hid2 + hid2 * out_dim + out_dim) * 4
                + (hid1 + hid2) * tb * 4             # f32 matmul accumulators
                + hid1 * tb * cbytes)                # h1 in compute dtype
    vmem_limit = int(min(32 * 2**20, max(16 * 2**20, 2 * vmem_est)))

    out_t = pl.pallas_call(
        functools.partial(mlp_kernel, fc3_on_mxu=fc3_on_mxu),
        out_shape=jax.ShapeDtypeStruct((out_dim, B_pad), jnp.float32),
        grid_spec=pltpu.PrefetchScalarGridSpec(
            num_scalar_prefetch=0,
            grid=grid,
            in_specs=[
                pl.BlockSpec((in_dim, tb), lambda i: (0, i)),  # x (transposed)
                full((hid1, in_dim)),                          # w1
                full((hid1, 1)),                               # b1
                full((hid2, hid1)),                            # w2
                full((hid2, 1)),                               # b2
                full(w3_shape),                                # w3
                full((out_dim, 1)),                            # b3
            ],
            out_specs=pl.BlockSpec((out_dim, tb), lambda i: (0, i)),
        ),
        compiler_params=pltpu.CompilerParams(
            dimension_semantics=("parallel",),
            vmem_limit_bytes=vmem_limit,
        ),
        cost_estimate=pl.CostEstimate(
            flops=flops, transcendentals=0, bytes_accessed=bytes_accessed),
    )(xt, w1c, b1c, w2c, b2c, w3c, b3c)

    # (out_dim, B_pad) -> (B, out_dim); trivial for out_dim == 1.
    return out_t[:, :B].T


def init_params(key, input_dim, output_dim=1):
    """PyTorch-layout params with nn.Linear default init U(-1/sqrt(fan_in), ...)."""
    ks = jax.random.split(key, 6)

    def linear(kw, kb, fan_in, fan_out):
        bound = float(1.0 / (fan_in ** 0.5))
        w = jax.random.uniform(kw, (fan_out, fan_in), jnp.float32, -bound, bound)
        b = jax.random.uniform(kb, (fan_out,), jnp.float32, -bound, bound)
        return w, b

    w1, b1 = linear(ks[0], ks[1], input_dim, 256)
    w2, b2 = linear(ks[2], ks[3], 256, 64)
    w3, b3 = linear(ks[4], ks[5], 64, output_dim)
    return {"w1": w1, "b1": b1, "w2": w2, "b2": b2, "w3": w3, "b3": b3}


def reference_forward(x, p):
    h1 = jnp.maximum(x @ p["w1"].T + p["b1"], 0.0)
    h2 = jnp.maximum(h1 @ p["w2"].T + p["b2"], 0.0)
    return h2 @ p["w3"].T + p["b3"]


if __name__ == "__main__":
    key = jax.random.PRNGKey(0)
    kx, kp = jax.random.split(key)

    input_dim = 32    # sliding-window size
    output_dim = 1    # one-step-ahead forecast
    batch = 300       # not a tile multiple -> exercises padding + multi-step grid

    x = jax.random.normal(kx, (batch, input_dim), jnp.float32)
    params = init_params(kp, input_dim, output_dim)
    ref = reference_forward(x, params)

    # Default path: bf16 MXU layers (f32 accumulation) -- bf16-rounding tolerance.
    out = jax.block_until_ready(custom_model_tsf_forward(x, params))
    assert out.shape == (batch, output_dim)
    assert jnp.allclose(out, ref, atol=5e-2, rtol=5e-2), "bf16 path mismatch"

    # f32 path: tight tolerance.
    out_f32 = jax.block_until_ready(
        custom_model_tsf_forward(x, params, compute_dtype=jnp.float32))
    assert out_f32.shape == (batch, output_dim)
    assert jnp.allclose(out_f32, ref, atol=1e-4, rtol=1e-4), "f32 path mismatch"

    # Larger out_dim exercises the gated MXU fc3 branch.
    params8 = init_params(kp, input_dim, 8)
    ref8 = reference_forward(x, params8)
    out8 = jax.block_until_ready(
        custom_model_tsf_forward(x, params8, compute_dtype=jnp.float32))
    assert out8.shape == (batch, 8)
    assert jnp.allclose(out8, ref8, atol=1e-4, rtol=1e-4), "fc3-MXU path mismatch"

    print("KERNEL_OK")
</pallas_src>

<mosaic_0001>
module attributes {stable_mosaic.version = 11 : i64} {
  func.func @mlp_kernel(%arg0: i32, %arg1: memref<32x128xbf16, #tpu.memory_space<vmem>>, %arg2: memref<256x32xbf16, #tpu.memory_space<vmem>>, %arg3: memref<256x1xbf16, #tpu.memory_space<vmem>>, %arg4: memref<64x256xbf16, #tpu.memory_space<vmem>>, %arg5: memref<64x1xf32, #tpu.memory_space<vmem>>, %arg6: memref<64x1xf32, #tpu.memory_space<vmem>>, %arg7: memref<1x1xf32, #tpu.memory_space<vmem>>, %arg8: memref<1x128xf32, #tpu.memory_space<vmem>>) attributes {dimension_semantics = [#tpu.dimension_semantics<parallel>], iteration_bounds = array<i64: 3>, scalar_prefetch = 0 : i64, scratch_operands = 0 : i64, tpu.core_type = #tpu.core_type<tc>, window_params = [{transform_indices = @transform_0, window_bounds = array<i64: 32, 128>}, {pipeline_mode = #tpu.pipeline_mode<synchronous>, transform_indices = @transform_1, window_bounds = array<i64: 256, 32>}, {pipeline_mode = #tpu.pipeline_mode<synchronous>, transform_indices = @transform_2, window_bounds = array<i64: 256, 1>}, {pipeline_mode = #tpu.pipeline_mode<synchronous>, transform_indices = @transform_3, window_bounds = array<i64: 64, 256>}, {pipeline_mode = #tpu.pipeline_mode<synchronous>, transform_indices = @transform_4, window_bounds = array<i64: 64, 1>}, {pipeline_mode = #tpu.pipeline_mode<synchronous>, transform_indices = @transform_5, window_bounds = array<i64: 64, 1>}, {pipeline_mode = #tpu.pipeline_mode<synchronous>, transform_indices = @transform_6, window_bounds = array<i64: 1, 1>}, {transform_indices = @transform_7, window_bounds = array<i64: 1, 128>}]} {
    %c0 = arith.constant 0 : index
    %c0_0 = arith.constant 0 : index
    %0 = vector.load %arg2[%c0, %c0_0] : memref<256x32xbf16, #tpu.memory_space<vmem>>, vector<256x32xbf16>
    %c0_1 = arith.constant 0 : index
    %c0_2 = arith.constant 0 : index
    %1 = vector.load %arg1[%c0_1, %c0_2] : memref<32x128xbf16, #tpu.memory_space<vmem>>, vector<32x128xbf16>
    %cst = arith.constant dense<0.000000e+00> : vector<256x128xf32>
    %2 = tpu.matmul %0, %1, %cst {dimension_numbers = #tpu.dot_dimension_numbers<[1], [0], [0], [1], [0, 0, 1, 1], [], []>} : vector<256x32xbf16>, vector<32x128xbf16>, vector<256x128xf32> -> vector<256x128xf32>
    %3 = arith.truncf %2 : vector<256x128xf32> to vector<256x128xbf16>
    %c0_3 = arith.constant 0 : index
    %c0_4 = arith.constant 0 : index
    %4 = vector.load %arg3[%c0_3, %c0_4] : memref<256x1xbf16, #tpu.memory_space<vmem>>, vector<256x1xbf16>
    %5 = vector.broadcast %4 : vector<256x1xbf16> to vector<256x128xbf16>
    %6 = arith.addf %3, %5 : vector<256x128xbf16>
    %cst_5 = arith.constant 0.000000e+00 : bf16
    %7 = vector.broadcast %cst_5 : bf16 to vector<256x128xbf16>
    %8 = arith.maximumf %6, %7 : vector<256x128xbf16>
    %c0_6 = arith.constant 0 : index
    %c0_7 = arith.constant 0 : index
    %9 = vector.load %arg4[%c0_6, %c0_7] : memref<64x256xbf16, #tpu.memory_space<vmem>>, vector<64x256xbf16>
    %cst_8 = arith.constant dense<0.000000e+00> : vector<64x128xf32>
    %10 = tpu.matmul %9, %8, %cst_8 {dimension_numbers = #tpu.dot_dimension_numbers<[1], [0], [0], [1], [0, 0, 1, 1], [], []>} : vector<64x256xbf16>, vector<256x128xbf16>, vector<64x128xf32> -> vector<64x128xf32>
    %c0_9 = arith.constant 0 : index
    %c0_10 = arith.constant 0 : index
    %11 = vector.load %arg5[%c0_9, %c0_10] : memref<64x1xf32, #tpu.memory_space<vmem>>, vector<64x1xf32>
    %12 = vector.broadcast %11 : vector<64x1xf32> to vector<64x128xf32>
    %13 = arith.addf %10, %12 : vector<64x128xf32>
    %cst_11 = arith.constant 0.000000e+00 : f32
    %14 = vector.broadcast %cst_11 : f32 to vector<64x128xf32>
    %15 = arith.maximumf %13, %14 : vector<64x128xf32>
    %c0_12 = arith.constant 0 : index
    %c0_13 = arith.constant 0 : index
    %16 = vector.load %arg6[%c0_12, %c0_13] : memref<64x1xf32, #tpu.memory_space<vmem>>, vector<64x1xf32>
    %17 = vector.broadcast %16 : vector<64x1xf32> to vector<64x128xf32>
    %18 = arith.mulf %15, %17 : vector<64x128xf32>
    %cst_14 = arith.constant dense<0.000000e+00> : vector<128xf32>
    %19 = vector.multi_reduction <add>, %18, %cst_14 [0] : vector<64x128xf32> to vector<128xf32>
    %20 = vector.shape_cast %19 : vector<128xf32> to vector<1x128xf32>
    %c0_15 = arith.constant 0 : index
    %c0_16 = arith.constant 0 : index
    %21 = vector.load %arg7[%c0_15, %c0_16] : memref<1x1xf32, #tpu.memory_space<vmem>>, vector<1x1xf32>
    %22 = vector.broadcast %21 : vector<1x1xf32> to vector<1x128xf32>
    %23 = arith.addf %20, %22 : vector<1x128xf32>
    %c0_17 = arith.constant 0 : index
    %c0_18 = arith.constant 0 : index
    %24 = vector.load %arg8[%c0_17, %c0_18] : memref<1x128xf32, #tpu.memory_space<vmem>>, vector<1x128xf32>
    tpu.vector_store %arg8[%c0_17, %c0_18], %23 {strides = array<i32>} : memref<1x128xf32, #tpu.memory_space<vmem>>, vector<1x128xf32>,
    return
  }
  func.func @transform_0(%arg0: i32) -> (i32, i32) {
    %c0_i32 = arith.constant 0 : i32
    %c0_i32_0 = arith.constant 0 : i32
    return %c0_i32, %arg0 : i32, i32
  }
  func.func @transform_1(%arg0: i32) -> (i32, i32) {
    %c0_i32 = arith.constant 0 : i32
    %c0_i32_0 = arith.constant 0 : i32
    %c0_i32_1 = arith.constant 0 : i32
    return %c0_i32, %c0_i32_0 : i32, i32
  }
  func.func @transform_2(%arg0: i32) -> (i32, i32) {
    %c0_i32 = arith.constant 0 : i32
    %c0_i32_0 = arith.constant 0 : i32
    %c0_i32_1 = arith.constant 0 : i32
    return %c0_i32, %c0_i32_0 : i32, i32
  }
  func.func @transform_3(%arg0: i32) -> (i32, i32) {
    %c0_i32 = arith.constant 0 : i32
    %c0_i32_0 = arith.constant 0 : i32
    %c0_i32_1 = arith.constant 0 : i32
    return %c0_i32, %c0_i32_0 : i32, i32
  }
  func.func @transform_4(%arg0: i32) -> (i32, i32) {
    %c0_i32 = arith.constant 0 : i32
    %c0_i32_0 = arith.constant 0 : i32
    %c0_i32_1 = arith.constant 0 : i32
    return %c0_i32, %c0_i32_0 : i32, i32
  }
  func.func @transform_5(%arg0: i32) -> (i32, i32) {
    %c0_i32 = arith.constant 0 : i32
    %c0_i32_0 = arith.constant 0 : i32
    %c0_i32_1 = arith.constant 0 : i32
    return %c0_i32, %c0_i32_0 : i32, i32
  }
  func.func @transform_6(%arg0: i32) -> (i32, i32) {
    %c0_i32 = arith.constant 0 : i32
    %c0_i32_0 = arith.constant 0 : i32
    %c0_i32_1 = arith.constant 0 : i32
    return %c0_i32, %c0_i32_0 : i32, i32
  }
  func.func @transform_7(%arg0: i32) -> (i32, i32) {
    %c0_i32 = arith.constant 0 : i32
    %c0_i32_0 = arith.constant 0 : i32
    return %c0_i32, %arg0 : i32, i32
  }
}

</mosaic_0001>

<llo_original>
// kernel: tpu_custom_call.1
$region0: #{tpu_custom_call.1}
  #allocation0 [shape = 'u32[]', space=smem, size = 0x4, offset = 0x4, fixed_abs, tag = 'smem constant byte address 0x4 - core index']
  #allocation1 [shape = 'u32[144,128]{1,0:T(1,128)}', space=vmem, size = 0x12000, scoped, tag = 'internal scratch']
  #allocation2 [shape = 'f32[1,1]{1,0:T(1,128)S(1)}', space=vmem, size = 0x200, scoped, tag = 'scoped memory for tpu_custom_call.1']
  %s0 = inlined_call_operand.vmem [shape: bf16[32,384], index: 0, kind: input, shape index: {}]
  %s1 = inlined_call_operand.vmem [shape: bf16[256,32], index: 1, kind: input, shape index: {}]
  %s2 = inlined_call_operand.vmem [shape: bf16[256,1], index: 2, kind: input, shape index: {}]
  %s3 = inlined_call_operand.vmem [shape: bf16[64,256], index: 3, kind: input, shape index: {}]
  %s4 = inlined_call_operand.vmem [shape: f32[64,1], index: 4, kind: input, shape index: {}]
  %s5 = inlined_call_operand.vmem [shape: f32[64,1], index: 5, kind: input, shape index: {}]
  %s6 = inlined_call_operand.<no memory space> [shape: f32[1,1], index: 6, kind: input, shape index: {}]
  %s7 = inlined_call_operand.hbm [shape: f32[1,384], index: 7, kind: output, shape index: {}]
  %s8 = sld [smem:[#allocation0]]
  $region102: #{tpu_custom_call.1} parent=0
    _
  %s10 = ssub.s32 1, %s8
  %s11 = scalar_select 0, %s10, %s8
  %v12 = vstv %s6
  %13 = vst [vmem:[#allocation2] sm:$0x1] %v12
  $region1: #{tpu_custom_call.1} parent=0
    #allocation3 [shape = 'u8[16384]{0}', space=vmem, size = 0x4000, scoped, tag = 'input window, operand 0']
    #allocation4 [shape = 'u8[1024]{0}', space=vmem, size = 0x400, scoped, tag = 'output window, operand 0']
    #allocation5 [shape = 's32[2]{0}', space=sflag, size = 0x8, scoped, tag = 'scoped memory for tpu_custom_call.1']
    %14 = vsyncpa [#allocation5], 0
    %s15 = scalar_lea.sflag [#allocation5], 1
    %16 = vsyncpa %s15, 0
    loop: start=0, step=1, limit=5
    $region2: #{tpu_custom_call.1} parent=1 // loop_pre_header
      _
    $region3: #{tpu_custom_call.1} parent=1 // loop_header
      %s18 = sphi 0, %s22
      %p19 = scmp.ge.s32.totalorder %s18, 5
      %s28 = sphi 0, %s30
      %s31 = sphi 0, %s28
      %s32 = sphi 0, %s31
      %s48 = sphi 0, %s32
      %s52 = sphi 0, %s52
      %s54 = sphi 0, %s52
      %s55 = sphi 0, %s54
      %s69 = sphi 0, %s55
      %s73 = sphi 0, %s73
      %s75 = sphi 0, %s73
      %s76 = sphi 0, %s75
      %s90 = sphi 0, %s76
      %s94 = sphi 0, %s94
      %s96 = sphi 0, %s94
      %s97 = sphi 0, %s96
      %s111 = sphi 0, %s97
      %s115 = sphi 0, %s115
      %s117 = sphi 0, %s115
      %s118 = sphi 0, %s117
      %s132 = sphi 0, %s118
      %s136 = sphi 0, %s136
      %s138 = sphi 0, %s136
      %s139 = sphi 0, %s138
      %s153 = sphi 0, %s139
      %s157 = sphi 0, %s157
      %s159 = sphi 0, %s157
      %s160 = sphi 0, %s159
      %s174 = sphi 0, %s160
      %s180 = sphi 0, %s182
      %s183 = sphi 0, %s180
      %s184 = sphi 0, %s183
      %s200 = sphi 0, %s184
    $region4: #{tpu_custom_call.1} parent=1 // loop_header_branch
      %21 = sbr.rel (%p19) target = $region8
    $region5: #{tpu_custom_call.1} parent=1 // loop_body
      %s23 = ssub.s32 %s18, 1
      %s24 = ssub.s32 %s18, 2
      %s25 = sadd.s32 %s18, 1
      %s26 = ssub.s32 %s18, %s25
      %p27 = scmp.eq.s32.totalorder %s26, 0
      %s29 = sadd.s32 %s28, 1
      %s30 = scalar_select %p27, %s28, %s29
      %p33 = pneg %p27
      %p34 = scmp.eq.s32.totalorder %s18, 2
      %p35 = por %p33, %p34
      %p36 = scmp.ne.s32.totalorder %s28, %s31
      %p37 = scmp.eq.s32.totalorder %s18, 0
      %p38 = por %p36, %p37
      %p39 = scmp.ne.s32.totalorder %s28, %s31
      %p40 = scmp.eq.s32.totalorder %s23, 2
      %p41 = por %p39, %p40
      %p42 = scmp.ne.s32.totalorder %s31, %s32
      %p43 = scmp.eq.s32.totalorder %s23, 0
      %p44 = por %p42, %p43
      %p45 = scmp.ne.s32.totalorder %s31, %s32
      %p46 = scmp.eq.s32.totalorder %s24, 2
      %p47 = por %p45, %p46
      %p49 = scmp.ne.s32.totalorder %s32, %s48
      %p50 = scmp.eq.s32.totalorder %s24, 0
      %p51 = por %p49, %p50
      %s53 = sadd.s32 %s52, 1
      %p56 = scmp.eq.s32.totalorder %s18, 2
      %p57 = scmp.ne.s32.totalorder %s52, %s54
      %p58 = scmp.eq.s32.totalorder %s18, 0
      %p59 = por %p57, %p58
      %p60 = scmp.ne.s32.totalorder %s52, %s54
      %p61 = scmp.eq.s32.totalorder %s23, 2
      %p62 = por %p60, %p61
      %p63 = scmp.ne.s32.totalorder %s54, %s55
      %p64 = scmp.eq.s32.totalorder %s23, 0
      %p65 = por %p63, %p64
      %p66 = scmp.ne.s32.totalorder %s54, %s55
      %p67 = scmp.eq.s32.totalorder %s24, 2
      %p68 = por %p66, %p67
      %p70 = scmp.ne.s32.totalorder %s55, %s69
      %p71 = scmp.eq.s32.totalorder %s24, 0
      %p72 = por %p70, %p71
      %s74 = sadd.s32 %s73, 1
      %p77 = scmp.eq.s32.totalorder %s18, 2
      %p78 = scmp.ne.s32.totalorder %s73, %s75
      %p79 = scmp.eq.s32.totalorder %s18, 0
      %p80 = por %p78, %p79
      %p81 = scmp.ne.s32.totalorder %s73, %s75
      %p82 = scmp.eq.s32.totalorder %s23, 2
      %p83 = por %p81, %p82
      %p84 = scmp.ne.s32.totalorder %s75, %s76
      %p85 = scmp.eq.s32.totalorder %s23, 0
      %p86 = por %p84, %p85
      %p87 = scmp.ne.s32.totalorder %s75, %s76
      %p88 = scmp.eq.s32.totalorder %s24, 2
      %p89 = por %p87, %p88
      %p91 = scmp.ne.s32.totalorder %s76, %s90
      %p92 = scmp.eq.s32.totalorder %s24, 0
      %p93 = por %p91, %p92
      %s95 = sadd.s32 %s94, 1
      %p98 = scmp.eq.s32.totalorder %s18, 2
      %p99 = scmp.ne.s32.totalorder %s94, %s96
      %p100 = scmp.eq.s32.totalorder %s18, 0
      %p101 = por %p99, %p100
      %p102 = scmp.ne.s32.totalorder %s94, %s96
      %p103 = scmp.eq.s32.totalorder %s23, 2
      %p104 = por %p102, %p103
      %p105 = scmp.ne.s32.totalorder %s96, %s97
      %p106 = scmp.eq.s32.totalorder %s23, 0
      %p107 = por %p105, %p106
      %p108 = scmp.ne.s32.totalorder %s96, %s97
      %p109 = scmp.eq.s32.totalorder %s24, 2
      %p110 = por %p108, %p109
      %p112 = scmp.ne.s32.totalorder %s97, %s111
      %p113 = scmp.eq.s32.totalorder %s24, 0
      %p114 = por %p112, %p113
      %s116 = sadd.s32 %s115, 1
      %p119 = scmp.eq.s32.totalorder %s18, 2
      %p120 = scmp.ne.s32.totalorder %s115, %s117
      %p121 = scmp.eq.s32.totalorder %s18, 0
      %p122 = por %p120, %p121
      %p123 = scmp.ne.s32.totalorder %s115, %s117
      %p124 = scmp.eq.s32.totalorder %s23, 2
      %p125 = por %p123, %p124
      %p126 = scmp.ne.s32.totalorder %s117, %s118
      %p127 = scmp.eq.s32.totalorder %s23, 0
      %p128 = por %p126, %p127
      %p129 = scmp.ne.s32.totalorder %s117, %s118
      %p130 = scmp.eq.s32.totalorder %s24, 2
      %p131 = por %p129, %p130
      %p133 = scmp.ne.s32.totalorder %s118, %s132
      %p134 = scmp.eq.s32.totalorder %s24, 0
      %p135 = por %p133, %p134
      %s137 = sadd.s32 %s136, 1
      %p140 = scmp.eq.s32.totalorder %s18, 2
      %p141 = scmp.ne.s32.totalorder %s136, %s138
      %p142 = scmp.eq.s32.totalorder %s18, 0
      %p143 = por %p141, %p142
      %p144 = scmp.ne.s32.totalorder %s136, %s138
      %p145 = scmp.eq.s32.totalorder %s23, 2
      %p146 = por %p144, %p145
      %p147 = scmp.ne.s32.totalorder %s138, %s139
      %p148 = scmp.eq.s32.totalorder %s23, 0
      %p149 = por %p147, %p148
      %p150 = scmp.ne.s32.totalorder %s138, %s139
      %p151 = scmp.eq.s32.totalorder %s24, 2
      %p152 = por %p150, %p151
      %p154 = scmp.ne.s32.totalorder %s139, %s153
      %p155 = scmp.eq.s32.totalorder %s24, 0
      %p156 = por %p154, %p155
      %s158 = sadd.s32 %s157, 1
      %p161 = scmp.eq.s32.totalorder %s18, 2
      %p162 = scmp.ne.s32.totalorder %s157, %s159
      %p163 = scmp.eq.s32.totalorder %s18, 0
      %p164 = por %p162, %p163
      %p165 = scmp.ne.s32.totalorder %s157, %s159
      %p166 = scmp.eq.s32.totalorder %s23, 2
      %p167 = por %p165, %p166
      %p168 = scmp.ne.s32.totalorder %s159, %s160
      %p169 = scmp.eq.s32.totalorder %s23, 0
      %p170 = por %p168, %p169
      %p171 = scmp.ne.s32.totalorder %s159, %s160
      %p172 = scmp.eq.s32.totalorder %s24, 2
      %p173 = por %p171, %p172
      %p175 = scmp.ne.s32.totalorder %s160, %s174
      %p176 = scmp.eq.s32.totalorder %s24, 0
      %p177 = por %p175, %p176
      %s178 = ssub.s32 %s18, %s25
      %p179 = scmp.eq.s32.totalorder %s178, 0
      %s181 = sadd.s32 %s180, 1
      %s182 = scalar_select %p179, %s180, %s181
      %p185 = pneg %p179
      %p186 = scmp.eq.s32.totalorder %s18, 2
      %p187 = por %p185, %p186
      %p188 = scmp.ne.s32.totalorder %s180, %s183
      %p189 = scmp.eq.s32.totalorder %s18, 0
      %p190 = por %p188, %p189
      %p191 = scmp.ne.s32.totalorder %s180, %s183
      %p192 = scmp.eq.s32.totalorder %s23, 2
      %p193 = por %p191, %p192
      %p194 = scmp.ne.s32.totalorder %s183, %s184
      %p195 = scmp.eq.s32.totalorder %s23, 0
      %p196 = por %p194, %p195
      %p197 = scmp.ne.s32.totalorder %s183, %s184
      %p198 = scmp.eq.s32.totalorder %s24, 2
      %p199 = por %p197, %p198
      %p201 = scmp.ne.s32.totalorder %s184, %s200
      %p202 = scmp.eq.s32.totalorder %s24, 0
      %p203 = por %p201, %p202
      %p204 = scmp.le.s32.totalorder 1, %s18
      %p205 = scmp.lt.s32.totalorder %s18, 4
      %p206 = pnand %p204, %p205
      %p207 = pneg %p206
      // Predicated region
      $region9: #{tpu_custom_call.1} parent=5 // pred_check
        _
      $region10: #{tpu_custom_call.1} parent=5 // pred_check_branch
        %209 = sbr.rel (%p206) target = $region12
      $region11: #{tpu_custom_call.1} parent=5 // pred_region
        %s210 = ssub.s32 %s18, 1
        // Predicated region
        $region13: #{tpu_custom_call.1} parent=11 // pred_check
          %p211 = pneg %p65
        $region14: #{tpu_custom_call.1} parent=11 // pred_check_branch
          %213 = sbr.rel (%p211) target = $region16
        $region15: #{tpu_custom_call.1} parent=11 // pred_region
          _
        $region16: #{tpu_custom_call.1} parent=11 // pred_fallthru
          _
        // Predicated region
        $region17: #{tpu_custom_call.1} parent=11 // pred_check
          %p214 = pneg %p86
        $region18: #{tpu_custom_call.1} parent=11 // pred_check_branch
          %216 = sbr.rel (%p214) target = $region20
        $region19: #{tpu_custom_call.1} parent=11 // pred_region
          _
        $region20: #{tpu_custom_call.1} parent=11 // pred_fallthru
          _
        // Predicated region
        $region21: #{tpu_custom_call.1} parent=11 // pred_check
          %p217 = pneg %p107
        $region22: #{tpu_custom_call.1} parent=11 // pred_check_branch
          %219 = sbr.rel (%p217) target = $region24
        $region23: #{tpu_custom_call.1} parent=11 // pred_region
          _
        $region24: #{tpu_custom_call.1} parent=11 // pred_fallthru
          _
        // Predicated region
        $region25: #{tpu_custom_call.1} parent=11 // pred_check
          %p220 = pneg %p128
        $region26: #{tpu_custom_call.1} parent=11 // pred_check_branch
          %222 = sbr.rel (%p220) target = $region28
        $region27: #{tpu_custom_call.1} parent=11 // pred_region
          _
        $region28: #{tpu_custom_call.1} parent=11 // pred_fallthru
          _
        // Predicated region
        $region29: #{tpu_custom_call.1} parent=11 // pred_check
          %p223 = pneg %p149
        $region30: #{tpu_custom_call.1} parent=11 // pred_check_branch
          %225 = sbr.rel (%p223) target = $region32
        $region31: #{tpu_custom_call.1} parent=11 // pred_region
          _
        $region32: #{tpu_custom_call.1} parent=11 // pred_fallthru
          _
        // Predicated region
        $region33: #{tpu_custom_call.1} parent=11 // pred_check
          %p226 = pneg %p170
        $region34: #{tpu_custom_call.1} parent=11 // pred_check_branch
          %228 = sbr.rel (%p226) target = $region36
        $region35: #{tpu_custom_call.1} parent=11 // pred_region
          _
        $region36: #{tpu_custom_call.1} parent=11 // pred_fallthru
          _
      $region12: #{tpu_custom_call.1} parent=5 // pred_fallthru
        _
      %p229 = scmp.lt.s32.totalorder %s18, 3
      // Predicated region
      $region37: #{tpu_custom_call.1} parent=5 // pred_check
        %p230 = pneg %p229
      $region38: #{tpu_custom_call.1} parent=5 // pred_check_branch
        %232 = sbr.rel (%p230) target = $region40
      $region39: #{tpu_custom_call.1} parent=5 // pred_region
        // Predicated region
        $region41: #{tpu_custom_call.1} parent=39 // pred_check
          %p233 = pneg %p38
        $region42: #{tpu_custom_call.1} parent=39 // pred_check_branch
          %235 = sbr.rel (%p233) target = $region44
        $region43: #{tpu_custom_call.1} parent=39 // pred_region
          %s236 = sand.u32 %s28, 1
          %s237 = sand.u32 %s28, 1
          %s238 = smul.addr %s237, 16
          %s239 = scalar_lea.vmem [#allocation3], %s238
          %s240 = smul.addr %s18, 4
          %s241 = scalar_lea.vmem %s0, %s240
          // Predicated region
          $region45: #{tpu_custom_call.1} parent=43 // pred_check
            _
          $region46: #{tpu_custom_call.1} parent=43 // pred_check_branch
            %243 = sbr.rel (0) target = $region48
          $region47: #{tpu_custom_call.1} parent=43 // pred_region
            // Predicated region
            $region49: #{tpu_custom_call.1} parent=47 // pred_check
              _
            $region50: #{tpu_custom_call.1} parent=47 // pred_check_branch
              %245 = sbr.rel target = $region52
            $region51: #{tpu_custom_call.1} parent=47 // pred_region
              // Predicated region
              $region64: #{tpu_custom_call.1} parent=51 // pred_check
                _
              $region65: #{tpu_custom_call.1} parent=51 // pred_check_branch
                %267 = sbr.rel (0) target = $region67
              $region66: #{tpu_custom_call.1} parent=51 // pred_region
                loop: start=0, step=1, limit=1
                $region68: #{tpu_custom_call.1} parent=66 // loop_pre_header
                  _
                $region69: #{tpu_custom_call.1} parent=66 // loop_header
                  %s269 = sphi 0, %s273
                  %p270 = scmp.ge.s32.totalorder %s269, 1
                  %s274 = sphi %s241, %s241
                  %s275 = sphi %s239, %s239
                $region70: #{tpu_custom_call.1} parent=66 // loop_header_branch
                  %272 = sbr.rel (%p270) target = $region74
                $region71: #{tpu_custom_call.1} parent=66 // loop_body
                  _
                $region72: #{tpu_custom_call.1} parent=66 // loop_footer
                  %s273 = sadd.s32 1, %s269
                $region73: #{tpu_custom_call.1} parent=66 // loop_footer_branch
                  %268 = sbr.rel target = $region69
                $region74: #{tpu_custom_call.1} parent=66 // loop_exit
                  _
                %s277 = ssub.s32 16, 1
                loop: start=0, step=1, limit=1
                $region75: #{tpu_custom_call.1} parent=66 // loop_pre_header
                  _
                $region76: #{tpu_custom_call.1} parent=66 // loop_header
                  %s279 = sphi 0, %s283
                  %p280 = scmp.ge.s32.totalorder %s279, 1
                  %s284 = sphi %s241, %s241
                  %s285 = sphi %s239, %s239
                $region77: #{tpu_custom_call.1} parent=66 // loop_header_branch
                  %282 = sbr.rel (%p280) target = $region81
                $region78: #{tpu_custom_call.1} parent=66 // loop_body
                  %v286 = vld [vmem:[%s284] sm:%s277]
                  %287 = vst [vmem:[%s285] sm:%s277] %v286
                  %v288 = vld [vmem:[%s284 + $0xc] sm:%s277]
                  %289 = vst [vmem:[%s285 + $0x4] sm:%s277] %v288
                  %v290 = vld [vmem:[%s284 + $0x18] sm:%s277]
                  %291 = vst [vmem:[%s285 + $0x8] sm:%s277] %v290
                  %v292 = vld [vmem:[%s284 + $0x24] sm:%s277]
                  %293 = vst [vmem:[%s285 + $0xc] sm:%s277] %v292
                $region79: #{tpu_custom_call.1} parent=66 // loop_footer
                  %s283 = sadd.s32 1, %s279
                $region80: #{tpu_custom_call.1} parent=66 // loop_footer_branch
                  %278 = sbr.rel target = $region76
                $region81: #{tpu_custom_call.1} parent=66 // loop_exit
                  _
              $region67: #{tpu_custom_call.1} parent=51 // pred_fallthru
                _
            $region52: #{tpu_custom_call.1} parent=47 // pred_fallthru
              _
            // Predicated region
            $region53: #{tpu_custom_call.1} parent=47 // pred_check
              _
            $region54: #{tpu_custom_call.1} parent=47 // pred_check_branch
              %247 = sbr.rel (0) target = $region56
            $region55: #{tpu_custom_call.1} parent=47 // pred_region
              %s249 = ssub.s32 16, 1
              loop: start=0, step=1, limit=1
              $region57: #{tpu_custom_call.1} parent=55 // loop_pre_header
                _
              $region58: #{tpu_custom_call.1} parent=55 // loop_header
                %s251 = sphi 0, %s255
                %p252 = scmp.ge.s32.totalorder %s251, 1
                %s256 = sphi %s241, %s241
                %s257 = sphi %s239, %s239
              $region59: #{tpu_custom_call.1} parent=55 // loop_header_branch
                %254 = sbr.rel (%p252) target = $region63
              $region60: #{tpu_custom_call.1} parent=55 // loop_body
                %v258 = vld [vmem:[%s256] sm:%s249]
                %259 = vst [vmem:[%s257] sm:%s249] %v258
                %v260 = vld [vmem:[%s256 + $0xc] sm:%s249]
                %261 = vst [vmem:[%s257 + $0x4] sm:%s249] %v260
                %v262 = vld [vmem:[%s256 + $0x18] sm:%s249]
                %263 = vst [vmem:[%s257 + $0x8] sm:%s249] %v262
                %v264 = vld [vmem:[%s256 + $0x24] sm:%s249]
                %265 = vst [vmem:[%s257 + $0xc] sm:%s249] %v264
              $region61: #{tpu_custom_call.1} parent=55 // loop_footer
                %s255 = sadd.s32 1, %s251
              $region62: #{tpu_custom_call.1} parent=55 // loop_footer_branch
                %250 = sbr.rel target = $region58
              $region63: #{tpu_custom_call.1} parent=55 // loop_exit
                _
            $region56: #{tpu_custom_call.1} parent=47 // pred_fallthru
              _
          $region48: #{tpu_custom_call.1} parent=43 // pred_fallthru
            _
          %294 = vnop
        $region44: #{tpu_custom_call.1} parent=39 // pred_fallthru
          _
      $region40: #{tpu_custom_call.1} parent=5 // pred_fallthru
        _
      %p295 = scmp.le.s32.totalorder 1, %s18
      %p296 = scmp.lt.s32.totalorder %s18, 4
      %p297 = pnand %p295, %p296
      %p298 = pneg %p297
      // Predicated region
      $region82: #{tpu_custom_call.1} parent=5 // pred_check
        _
      $region83: #{tpu_custom_call.1} parent=5 // pred_check_branch
        %300 = sbr.rel (%p297) target = $region85
      $region84: #{tpu_custom_call.1} parent=5 // pred_region
        %s301 = ssub.s32 %s18, 1
        %s302 = sand.u32 %s31, 1
        %s303 = sand.u32 %s31, 1
        %s304 = smul.addr %s303, 16
        %s305 = scalar_lea.vmem [#allocation3], %s304
        // Predicated region
        $region86: #{tpu_custom_call.1} parent=84 // pred_check
          %p306 = pneg %p44
        $region87: #{tpu_custom_call.1} parent=84 // pred_check_branch
          %308 = sbr.rel (%p306) target = $region89
        $region88: #{tpu_custom_call.1} parent=84 // pred_region
          _
        $region89: #{tpu_custom_call.1} parent=84 // pred_fallthru
          _
        %s309 = sand.u32 %s31, 1
        %s310 = sand.u32 %s31, 1
        %s311 = smul.addr %s310, 16
        %s312 = scalar_lea.vmem [#allocation3], %s311
        %p313 = pneg %p44
        %p314 = pneg %p41
        %p315 = pneg %p65
        %p316 = pneg %p62
        %p317 = pneg %p86
        %p318 = pneg %p83
        %p319 = pneg %p107
        %p320 = pneg %p104
        %p321 = pneg %p128
        %p322 = pneg %p125
        %p323 = pneg %p149
        %p324 = pneg %p146
        %p325 = pneg %p170
        %p326 = pneg %p167
        %p327 = pneg %p196
        %p328 = pneg %p193
        %s329 = sand.u32 %s183, 1
        %s330 = scalar_lea.sflag [#allocation5], %s329
        %s331 = sand.u32 %s183, 1
        %s332 = scalar_lea.vmem [#allocation4], %s331
        %v334 = vld [vmem:[%s1] sm:$0xf]
        %v335 = vld [vmem:[%s1 + $0x4] sm:$0xf]
        %v336 = vld [vmem:[%s1 + $0x8] sm:$0xf]
        %v337 = vld [vmem:[%s1 + $0xc] sm:$0xf]
        %v338 = vld [vmem:[%s1 + $0x10] sm:$0xf]
        %v339 = vld [vmem:[%s1 + $0x14] sm:$0xf]
        %v340 = vld [vmem:[%s1 + $0x18] sm:$0xf]
        %v341 = vld [vmem:[%s1 + $0x1c] sm:$0xf]
        %v342 = vld [vmem:[%s1 + $0x20] sm:$0xf]
        %v343 = vld [vmem:[%s1 + $0x24] sm:$0xf]
        %v344 = vld [vmem:[%s1 + $0x28] sm:$0xf]
        %v345 = vld [vmem:[%s1 + $0x2c] sm:$0xf]
        %v346 = vld [vmem:[%s1 + $0x30] sm:$0xf]
        %v347 = vld [vmem:[%s1 + $0x34] sm:$0xf]
        %v348 = vld [vmem:[%s1 + $0x38] sm:$0xf]
        %v349 = vld [vmem:[%s1 + $0x3c] sm:$0xf]
        %v350 = vld [vmem:[%s1 + $0x40] sm:$0xf]
        %v351 = vld [vmem:[%s1 + $0x44] sm:$0xf]
        %v352 = vld [vmem:[%s1 + $0x48] sm:$0xf]
        %v353 = vld [vmem:[%s1 + $0x4c] sm:$0xf]
        %v354 = vld [vmem:[%s1 + $0x50] sm:$0xf]
        %v355 = vld [vmem:[%s1 + $0x54] sm:$0xf]
        %v356 = vld [vmem:[%s1 + $0x58] sm:$0xf]
        %v357 = vld [vmem:[%s1 + $0x5c] sm:$0xf]
        %v358 = vld [vmem:[%s1 + $0x60] sm:$0xf]
        %v359 = vld [vmem:[%s1 + $0x64] sm:$0xf]
        %v360 = vld [vmem:[%s1 + $0x68] sm:$0xf]
        %v361 = vld [vmem:[%s1 + $0x6c] sm:$0xf]
        %v362 = vld [vmem:[%s1 + $0x70] sm:$0xf]
        %v363 = vld [vmem:[%s1 + $0x74] sm:$0xf]
        %v364 = vld [vmem:[%s1 + $0x78] sm:$0xf]
        %v365 = vld [vmem:[%s1 + $0x7c] sm:$0xf]
        %v366 = vld [vmem:[%s305] sm:$0xf]
        %v367 = vld [vmem:[%s305 + $0x4] sm:$0xf]
        %v368 = vld [vmem:[%s305 + $0x8] sm:$0xf]
        %v369 = vld [vmem:[%s305 + $0xc] sm:$0xf]
        %v402 = vunpack.c.l.b16 %v334
        %v403 = vunpack.c.l.b16 %v335
        %v404 = vunpack.c.l.b16 %v336
        %v405 = vunpack.c.l.b16 %v337
        %v406 = vunpack.c.l.b16 %v338
        %v407 = vunpack.c.l.b16 %v339
        %v408 = vunpack.c.l.b16 %v340
        %v409 = vunpack.c.l.b16 %v341
        %v410 = vunpack.c.l.b16 %v342
        %v411 = vunpack.c.l.b16 %v343
        %v412 = vunpack.c.l.b16 %v344
        %v413 = vunpack.c.l.b16 %v345
        %v414 = vunpack.c.l.b16 %v346
        %v415 = vunpack.c.l.b16 %v347
        %v416 = vunpack.c.l.b16 %v348
        %v417 = vunpack.c.l.b16 %v349
        %v418 = vunpack.c.l.b16 %v350
        %v419 = vunpack.c.l.b16 %v351
        %v420 = vunpack.c.l.b16 %v352
        %v421 = vunpack.c.l.b16 %v353
        %v422 = vunpack.c.l.b16 %v354
        %v423 = vunpack.c.l.b16 %v355
        %v424 = vunpack.c.l.b16 %v356
        %v425 = vunpack.c.l.b16 %v357
        %v426 = vunpack.c.l.b16 %v358
        %v427 = vunpack.c.l.b16 %v359
        %v428 = vunpack.c.l.b16 %v360
        %v429 = vunpack.c.l.b16 %v361
        %v430 = vunpack.c.l.b16 %v362
        %v431 = vunpack.c.l.b16 %v363
        %v432 = vunpack.c.l.b16 %v364
        %v433 = vunpack.c.l.b16 %v365
        %v434 = vpack.c.b16 %v403, %v402
        %v435 = vpack.c.b16 %v405, %v404
        %v436 = vpack.c.b16 %v407, %v406
        %v437 = vpack.c.b16 %v409, %v408
        %v438 = vpack.c.b16 %v411, %v410
        %v439 = vpack.c.b16 %v413, %v412
        %v440 = vpack.c.b16 %v415, %v414
        %v441 = vpack.c.b16 %v417, %v416
        %v442 = vpack.c.b16 %v419, %v418
        %v443 = vpack.c.b16 %v421, %v420
        %v444 = vpack.c.b16 %v423, %v422
        %v445 = vpack.c.b16 %v425, %v424
        %v446 = vpack.c.b16 %v427, %v426
        %v447 = vpack.c.b16 %v429, %v428
        %v448 = vpack.c.b16 %v431, %v430
        %v449 = vpack.c.b16 %v433, %v432
        %v454 = vunpack.c.l.b16 %v366
        %v455 = vunpack.c.l.b16 %v367
        %v456 = vunpack.c.l.b16 %v368
        %v457 = vunpack.c.l.b16 %v369
        %v458 = vpack.c.b16 %v455, %v454
        %v459 = vpack.c.b16 %v457, %v456
        %vm462 = vcmask 261120
        %v464 = vsel %vm462, %v434, 0
        %v467 = vsel %vm462, %v435, 0
        %v470 = vsel %vm462, %v436, 0
        %v473 = vsel %vm462, %v437, 0
        %v476 = vsel %vm462, %v438, 0
        %v479 = vsel %vm462, %v439, 0
        %v482 = vsel %vm462, %v440, 0
        %v485 = vsel %vm462, %v441, 0
        %v488 = vsel %vm462, %v442, 0
        %v491 = vsel %vm462, %v443, 0
        %v494 = vsel %vm462, %v444, 0
        %v497 = vsel %vm462, %v445, 0
        %v500 = vsel %vm462, %v446, 0
        %v503 = vsel %vm462, %v447, 0
        %v506 = vsel %vm462, %v448, 0
        %v509 = vsel %vm462, %v449, 0
        %511 = vmatprep.subr.bf16.mxu0 0
        %512 = vmatpush1.bf16.msra.mxu0 0
        %513 = vmatprep.subr.bf16.mxu0 0
        %514 = vmatpush1.bf16.msra.mxu0 0
        %515 = vmatprep.subr.bf16.mxu0 0
        %516 = vmatpush1.bf16.msra.mxu0 0
        %517 = vmatprep.subr.bf16.mxu0 0
        %518 = vmatpush1.bf16.msra.mxu0 0
        %519 = vmatprep.subr.bf16.mxu0 0
        %520 = vmatpush1.bf16.msra.mxu0 0
        %521 = vmatprep.subr.bf16.mxu0 0
        %522 = vmatpush1.bf16.msra.mxu0 0
        %523 = vmatprep.subr.bf16.mxu0 0
        %524 = vmatpush1.bf16.msra.mxu0 %v459
        %525 = vmatprep.subr.bf16.mxu0 0
        %526 = vmatpush1.bf16.msra.mxu0 %v458
        %527 = vmatprep.subr.bf16.mxu0 0
        %528 = vmatpush2.bf16.msra.mxu0 0
        %529 = vmatprep.subr.bf16.mxu0 0
        %530 = vmatpush2.bf16.msra.mxu0 0
        %531 = vmatprep.subr.bf16.mxu0 0
        %532 = vmatpush2.bf16.msra.mxu0 0
        %533 = vmatprep.subr.bf16.mxu0 0
        %534 = vmatpush2.bf16.msra.mxu0 0
        %535 = vmatprep.subr.bf16.mxu0 0
        %536 = vmatpush2.bf16.msra.mxu0 0
        %537 = vmatprep.subr.bf16.mxu0 0
        %538 = vmatpush2.bf16.msra.mxu0 0
        %539 = vmatprep.subr.bf16.mxu0 0
        %540 = vmatpush2.bf16.msra.mxu0 0
        %541 = vmatprep.subr.bf16.mxu0 0
        %542 = vmatpush2.bf16.msra.mxu0 0
        %543 = vmatprep.mubr.bf16.mxu0 0
        %544 = vmatmul.mubr.bf16.gmra.mxu0 %v464
        %v545 = vpop.f32.mrf.mxu0
        %v546 = vadd.f32 0.0, %v545
        %v547 = vpop.f32.mrf.mxu0
        %v548 = vpop.f32.mrf.mxu0
        %v549 = vadd.f32 0.0, %v548
        %v550 = vpop.f32.mrf.mxu0
        %551 = vmatprep.mubr.bf16.mxu0 0
        %552 = vmatmul.mubr.bf16.gmra.mxu0 %v467
        %v553 = vpop.f32.mrf.mxu0
        %v554 = vadd.f32 0.0, %v553
        %v555 = vpop.f32.mrf.mxu0
        %v556 = vpop.f32.mrf.mxu0
        %v557 = vadd.f32 0.0, %v556
        %v558 = vpop.f32.mrf.mxu0
        %559 = vmatprep.mubr.bf16.mxu0 0
        %560 = vmatmul.mubr.bf16.gmra.mxu0 %v470
        %v561 = vpop.f32.mrf.mxu0
        %v562 = vadd.f32 0.0, %v561
        %v563 = vpop.f32.mrf.mxu0
        %v564 = vpop.f32.mrf.mxu0
        %v565 = vadd.f32 0.0, %v564
        %v566 = vpop.f32.mrf.mxu0
        %567 = vmatprep.mubr.bf16.mxu0 0
        %568 = vmatmul.mubr.bf16.gmra.mxu0 %v473
        %v569 = vpop.f32.mrf.mxu0
        %v570 = vadd.f32 0.0, %v569
        %v571 = vpop.f32.mrf.mxu0
        %v572 = vpop.f32.mrf.mxu0
        %v573 = vadd.f32 0.0, %v572
        %v574 = vpop.f32.mrf.mxu0
        %575 = vmatprep.mubr.bf16.mxu0 0
        %576 = vmatmul.mubr.bf16.gmra.mxu0 %v476
        %v577 = vpop.f32.mrf.mxu0
        %v578 = vadd.f32 0.0, %v577
        %v579 = vpop.f32.mrf.mxu0
        %v580 = vpop.f32.mrf.mxu0
        %v581 = vadd.f32 0.0, %v580
        %v582 = vpop.f32.mrf.mxu0
        %583 = vmatprep.mubr.bf16.mxu0 0
        %584 = vmatmul.mubr.bf16.gmra.mxu0 %v479
        %v585 = vpop.f32.mrf.mxu0
        %v586 = vadd.f32 0.0, %v585
        %v587 = vpop.f32.mrf.mxu0
        %v588 = vpop.f32.mrf.mxu0
        %v589 = vadd.f32 0.0, %v588
        %v590 = vpop.f32.mrf.mxu0
        %591 = vmatprep.mubr.bf16.mxu0 0
        %592 = vmatmul.mubr.bf16.gmra.mxu0 %v482
        %v593 = vpop.f32.mrf.mxu0
        %v594 = vadd.f32 0.0, %v593
        %v595 = vpop.f32.mrf.mxu0
        %v596 = vpop.f32.mrf.mxu0
        %v597 = vadd.f32 0.0, %v596
        %v598 = vpop.f32.mrf.mxu0
        %599 = vmatprep.mubr.bf16.mxu0 0
        %600 = vmatmul.mubr.bf16.gmra.mxu0 %v485
        %v601 = vpop.f32.mrf.mxu0
        %v602 = vadd.f32 0.0, %v601
        %v603 = vpop.f32.mrf.mxu0
        %v604 = vpop.f32.mrf.mxu0
        %v605 = vadd.f32 0.0, %v604
        %v606 = vpop.f32.mrf.mxu0
        %607 = vmatprep.mubr.bf16.mxu0 0
        %608 = vmatmul.mubr.bf16.gmra.mxu0 %v488
        %v609 = vpop.f32.mrf.mxu0
        %v610 = vadd.f32 0.0, %v609
        %v611 = vpop.f32.mrf.mxu0
        %v612 = vpop.f32.mrf.mxu0
        %v613 = vadd.f32 0.0, %v612
        %v614 = vpop.f32.mrf.mxu0
        %615 = vmatprep.mubr.bf16.mxu0 0
        %616 = vmatmul.mubr.bf16.gmra.mxu0 %v491
        %v617 = vpop.f32.mrf.mxu0
        %v618 = vadd.f32 0.0, %v617
        %v619 = vpop.f32.mrf.mxu0
        %v620 = vpop.f32.mrf.mxu0
        %v621 = vadd.f32 0.0, %v620
        %v622 = vpop.f32.mrf.mxu0
        %623 = vmatprep.mubr.bf16.mxu0 0
        %624 = vmatmul.mubr.bf16.gmra.mxu0 %v494
        %v625 = vpop.f32.mrf.mxu0
        %v626 = vadd.f32 0.0, %v625
        %v627 = vpop.f32.mrf.mxu0
        %v628 = vpop.f32.mrf.mxu0
        %v629 = vadd.f32 0.0, %v628
        %v630 = vpop.f32.mrf.mxu0
        %631 = vmatprep.mubr.bf16.mxu0 0
        %632 = vmatmul.mubr.bf16.gmra.mxu0 %v497
        %v633 = vpop.f32.mrf.mxu0
        %v634 = vadd.f32 0.0, %v633
        %v635 = vpop.f32.mrf.mxu0
        %v636 = vpop.f32.mrf.mxu0
        %v637 = vadd.f32 0.0, %v636
        %v638 = vpop.f32.mrf.mxu0
        %639 = vmatprep.mubr.bf16.mxu0 0
        %640 = vmatmul.mubr.bf16.gmra.mxu0 %v500
        %v641 = vpop.f32.mrf.mxu0
        %v642 = vadd.f32 0.0, %v641
        %v643 = vpop.f32.mrf.mxu0
        %v644 = vpop.f32.mrf.mxu0
        %v645 = vadd.f32 0.0, %v644
        %v646 = vpop.f32.mrf.mxu0
        %647 = vmatprep.mubr.bf16.mxu0 0
        %648 = vmatmul.mubr.bf16.gmra.mxu0 %v503
        %v649 = vpop.f32.mrf.mxu0
        %v650 = vadd.f32 0.0, %v649
        %v651 = vpop.f32.mrf.mxu0
        %v652 = vpop.f32.mrf.mxu0
        %v653 = vadd.f32 0.0, %v652
        %v654 = vpop.f32.mrf.mxu0
        %655 = vmatprep.mubr.bf16.mxu0 0
        %656 = vmatmul.mubr.bf16.gmra.mxu0 %v506
        %v657 = vpop.f32.mrf.mxu0
        %v658 = vadd.f32 0.0, %v657
        %v659 = vpop.f32.mrf.mxu0
        %v660 = vpop.f32.mrf.mxu0
        %v661 = vadd.f32 0.0, %v660
        %v662 = vpop.f32.mrf.mxu0
        %663 = vmatprep.mubr.bf16.mxu0 0
        %664 = vmatmul.mubr.bf16.gmra.mxu0 %v509
        %v665 = vpop.f32.mrf.mxu0
        %v666 = vadd.f32 0.0, %v665
        %v667 = vpop.f32.mrf.mxu0
        %v668 = vpop.f32.mrf.mxu0
        %v669 = vadd.f32 0.0, %v668
        %v670 = vpop.f32.mrf.mxu0
        %671 = vdwg.mxu0
        %v672 = vpack.c.bf16 %v549, %v546
        %v673 = vpack.c.bf16 %v557, %v554
        %v674 = vpack.c.bf16 %v565, %v562
        %v675 = vpack.c.bf16 %v573, %v570
        %v676 = vpack.c.bf16 %v581, %v578
        %v677 = vpack.c.bf16 %v589, %v586
        %v678 = vpack.c.bf16 %v597, %v594
        %v679 = vpack.c.bf16 %v605, %v602
        %v680 = vpack.c.bf16 %v613, %v610
        %v681 = vpack.c.bf16 %v621, %v618
        %v682 = vpack.c.bf16 %v629, %v626
        %v683 = vpack.c.bf16 %v637, %v634
        %v684 = vpack.c.bf16 %v645, %v642
        %v685 = vpack.c.bf16 %v653, %v650
        %v686 = vpack.c.bf16 %v661, %v658
        %v687 = vpack.c.bf16 %v669, %v666
        %v688 = vld [vmem:[%s2] sm:$0xf]
        %v689 = vld [vmem:[%s2 + $0x4] sm:$0xf]
        %v690 = vld [vmem:[%s2 + $0x8] sm:$0xf]
        %v691 = vld [vmem:[%s2 + $0xc] sm:$0xf]
        %v692 = vld [vmem:[%s2 + $0x10] sm:$0xf]
        %v693 = vld [vmem:[%s2 + $0x14] sm:$0xf]
        %v694 = vld [vmem:[%s2 + $0x18] sm:$0xf]
        %v695 = vld [vmem:[%s2 + $0x1c] sm:$0xf]
        %v696 = vld [vmem:[%s2 + $0x20] sm:$0xf]
        %v697 = vld [vmem:[%s2 + $0x24] sm:$0xf]
        %v698 = vld [vmem:[%s2 + $0x28] sm:$0xf]
        %v699 = vld [vmem:[%s2 + $0x2c] sm:$0xf]
        %v700 = vld [vmem:[%s2 + $0x30] sm:$0xf]
        %v701 = vld [vmem:[%s2 + $0x34] sm:$0xf]
        %v702 = vld [vmem:[%s2 + $0x38] sm:$0xf]
        %v703 = vld [vmem:[%s2 + $0x3c] sm:$0xf]
        %v704 = vld [vmem:[%s2 + $0x40] sm:$0xf]
        %v705 = vld [vmem:[%s2 + $0x44] sm:$0xf]
        %v706 = vld [vmem:[%s2 + $0x48] sm:$0xf]
        %v707 = vld [vmem:[%s2 + $0x4c] sm:$0xf]
        %v708 = vld [vmem:[%s2 + $0x50] sm:$0xf]
        %v709 = vld [vmem:[%s2 + $0x54] sm:$0xf]
        %v710 = vld [vmem:[%s2 + $0x58] sm:$0xf]
        %v711 = vld [vmem:[%s2 + $0x5c] sm:$0xf]
        %v712 = vld [vmem:[%s2 + $0x60] sm:$0xf]
        %v713 = vld [vmem:[%s2 + $0x64] sm:$0xf]
        %v714 = vld [vmem:[%s2 + $0x68] sm:$0xf]
        %v715 = vld [vmem:[%s2 + $0x6c] sm:$0xf]
        %v716 = vld [vmem:[%s2 + $0x70] sm:$0xf]
        %v717 = vld [vmem:[%s2 + $0x74] sm:$0xf]
        %v718 = vld [vmem:[%s2 + $0x78] sm:$0xf]
        %v719 = vld [vmem:[%s2 + $0x7c] sm:$0xf]
        %721 = vset.pattern.permute.xlu0 0
        %722 = vperm.xlu0 %721, %v688
        %v723 = vpop.permute.xlu0 %722
        %v726 = vunpack.c.l.s4 839922192
        %v727 = vunpack.c.0.s8 %v726
        %v728 = vlaneseq
        %v729 = vshrl.u32 %v728, 7
        %v730 = vsub.s32 %v727, %v729
        %v731 = vrot.slane %v723, %v730
        %733 = vset.pattern.permute.xlu0 0
        %734 = vperm.xlu0 %733, %v689
        %v735 = vpop.permute.xlu0 %734
        %v738 = vunpack.c.l.s4 839922192
        %v739 = vunpack.c.0.s8 %v738
        %v740 = vlaneseq
        %v741 = vshrl.u32 %v740, 7
        %v742 = vsub.s32 %v739, %v741
        %v743 = vrot.slane %v735, %v742
        %745 = vset.pattern.permute.xlu0 0
        %746 = vperm.xlu0 %745, %v690
        %v747 = vpop.permute.xlu0 %746
        %v750 = vunpack.c.l.s4 839922192
        %v751 = vunpack.c.0.s8 %v750
        %v752 = vlaneseq
        %v753 = vshrl.u32 %v752, 7
        %v754 = vsub.s32 %v751, %v753
        %v755 = vrot.slane %v747, %v754
        %757 = vset.pattern.permute.xlu0 0
        %758 = vperm.xlu0 %757, %v691
        %v759 = vpop.permute.xlu0 %758
        %v762 = vunpack.c.l.s4 839922192
        %v763 = vunpack.c.0.s8 %v762
        %v764 = vlaneseq
        %v765 = vshrl.u32 %v764, 7
        %v766 = vsub.s32 %v763, %v765
        %v767 = vrot.slane %v759, %v766
        %769 = vset.pattern.permute.xlu0 0
        %770 = vperm.xlu0 %769, %v692
        %v771 = vpop.permute.xlu0 %770
        %v774 = vunpack.c.l.s4 839922192
        %v775 = vunpack.c.0.s8 %v774
        %v776 = vlaneseq
        %v777 = vshrl.u32 %v776, 7
        %v778 = vsub.s32 %v775, %v777
        %v779 = vrot.slane %v771, %v778
        %781 = vset.pattern.permute.xlu0 0
        %782 = vperm.xlu0 %781, %v693
        %v783 = vpop.permute.xlu0 %782
        %v786 = vunpack.c.l.s4 839922192
        %v787 = vunpack.c.0.s8 %v786
        %v788 = vlaneseq
        %v789 = vshrl.u32 %v788, 7
        %v790 = vsub.s32 %v787, %v789
        %v791 = vrot.slane %v783, %v790
        %793 = vset.pattern.permute.xlu0 0
        %794 = vperm.xlu0 %793, %v694
        %v795 = vpop.permute.xlu0 %794
        %v798 = vunpack.c.l.s4 839922192
        %v799 = vunpack.c.0.s8 %v798
        %v800 = vlaneseq
        %v801 = vshrl.u32 %v800, 7
        %v802 = vsub.s32 %v799, %v801
        %v803 = vrot.slane %v795, %v802
        %805 = vset.pattern.permute.xlu0 0
        %806 = vperm.xlu0 %805, %v695
        %v807 = vpop.permute.xlu0 %806
        %v810 = vunpack.c.l.s4 839922192
        %v811 = vunpack.c.0.s8 %v810
        %v812 = vlaneseq
        %v813 = vshrl.u32 %v812, 7
        %v814 = vsub.s32 %v811, %v813
        %v815 = vrot.slane %v807, %v814
        %817 = vset.pattern.permute.xlu0 0
        %818 = vperm.xlu0 %817, %v696
        %v819 = vpop.permute.xlu0 %818
        %v822 = vunpack.c.l.s4 839922192
        %v823 = vunpack.c.0.s8 %v822
        %v824 = vlaneseq
        %v825 = vshrl.u32 %v824, 7
        %v826 = vsub.s32 %v823, %v825
        %v827 = vrot.slane %v819, %v826
        %829 = vset.pattern.permute.xlu0 0
        %830 = vperm.xlu0 %829, %v697
        %v831 = vpop.permute.xlu0 %830
        %v834 = vunpack.c.l.s4 839922192
        %v835 = vunpack.c.0.s8 %v834
        %v836 = vlaneseq
        %v837 = vshrl.u32 %v836, 7
        %v838 = vsub.s32 %v835, %v837
        %v839 = vrot.slane %v831, %v838
        %841 = vset.pattern.permute.xlu0 0
        %842 = vperm.xlu0 %841, %v698
        %v843 = vpop.permute.xlu0 %842
        %v846 = vunpack.c.l.s4 839922192
        %v847 = vunpack.c.0.s8 %v846
        %v848 = vlaneseq
        %v849 = vshrl.u32 %v848, 7
        %v850 = vsub.s32 %v847, %v849
        %v851 = vrot.slane %v843, %v850
        %853 = vset.pattern.permute.xlu0 0
        %854 = vperm.xlu0 %853, %v699
        %v855 = vpop.permute.xlu0 %854
        %v858 = vunpack.c.l.s4 839922192
        %v859 = vunpack.c.0.s8 %v858
        %v860 = vlaneseq
        %v861 = vshrl.u32 %v860, 7
        %v862 = vsub.s32 %v859, %v861
        %v863 = vrot.slane %v855, %v862
        %865 = vset.pattern.permute.xlu0 0
        %866 = vperm.xlu0 %865, %v700
        %v867 = vpop.permute.xlu0 %866
        %v870 = vunpack.c.l.s4 839922192
        %v871 = vunpack.c.0.s8 %v870
        %v872 = vlaneseq
        %v873 = vshrl.u32 %v872, 7
        %v874 = vsub.s32 %v871, %v873
        %v875 = vrot.slane %v867, %v874
        %877 = vset.pattern.permute.xlu0 0
        %878 = vperm.xlu0 %877, %v701
        %v879 = vpop.permute.xlu0 %878
        %v882 = vunpack.c.l.s4 839922192
        %v883 = vunpack.c.0.s8 %v882
        %v884 = vlaneseq
        %v885 = vshrl.u32 %v884, 7
        %v886 = vsub.s32 %v883, %v885
        %v887 = vrot.slane %v879, %v886
        %889 = vset.pattern.permute.xlu0 0
        %890 = vperm.xlu0 %889, %v702
        %v891 = vpop.permute.xlu0 %890
        %v894 = vunpack.c.l.s4 839922192
        %v895 = vunpack.c.0.s8 %v894
        %v896 = vlaneseq
        %v897 = vshrl.u32 %v896, 7
        %v898 = vsub.s32 %v895, %v897
        %v899 = vrot.slane %v891, %v898
        %901 = vset.pattern.permute.xlu0 0
        %902 = vperm.xlu0 %901, %v703
        %v903 = vpop.permute.xlu0 %902
        %v906 = vunpack.c.l.s4 839922192
        %v907 = vunpack.c.0.s8 %v906
        %v908 = vlaneseq
        %v909 = vshrl.u32 %v908, 7
        %v910 = vsub.s32 %v907, %v909
        %v911 = vrot.slane %v903, %v910
        %913 = vset.pattern.permute.xlu0 0
        %914 = vperm.xlu0 %913, %v704
        %v915 = vpop.permute.xlu0 %914
        %v918 = vunpack.c.l.s4 839922192
        %v919 = vunpack.c.0.s8 %v918
        %v920 = vlaneseq
        %v921 = vshrl.u32 %v920, 7
        %v922 = vsub.s32 %v919, %v921
        %v923 = vrot.slane %v915, %v922
        %925 = vset.pattern.permute.xlu0 0
        %926 = vperm.xlu0 %925, %v705
        %v927 = vpop.permute.xlu0 %926
        %v930 = vunpack.c.l.s4 839922192
        %v931 = vunpack.c.0.s8 %v930
        %v932 = vlaneseq
        %v933 = vshrl.u32 %v932, 7
        %v934 = vsub.s32 %v931, %v933
        %v935 = vrot.slane %v927, %v934
        %937 = vset.pattern.permute.xlu0 0
        %938 = vperm.xlu0 %937, %v706
        %v939 = vpop.permute.xlu0 %938
        %v942 = vunpack.c.l.s4 839922192
        %v943 = vunpack.c.0.s8 %v942
        %v944 = vlaneseq
        %v945 = vshrl.u32 %v944, 7
        %v946 = vsub.s32 %v943, %v945
        %v947 = vrot.slane %v939, %v946
        %949 = vset.pattern.permute.xlu0 0
        %950 = vperm.xlu0 %949, %v707
        %v951 = vpop.permute.xlu0 %950
        %v954 = vunpack.c.l.s4 839922192
        %v955 = vunpack.c.0.s8 %v954
        %v956 = vlaneseq
        %v957 = vshrl.u32 %v956, 7
        %v958 = vsub.s32 %v955, %v957
        %v959 = vrot.slane %v951, %v958
        %961 = vset.pattern.permute.xlu0 0
        %962 = vperm.xlu0 %961, %v708
        %v963 = vpop.permute.xlu0 %962
        %v966 = vunpack.c.l.s4 839922192
        %v967 = vunpack.c.0.s8 %v966
        %v968 = vlaneseq
        %v969 = vshrl.u32 %v968, 7
        %v970 = vsub.s32 %v967, %v969
        %v971 = vrot.slane %v963, %v970
        %973 = vset.pattern.permute.xlu0 0
        %974 = vperm.xlu0 %973, %v709
        %v975 = vpop.permute.xlu0 %974
        %v978 = vunpack.c.l.s4 839922192
        %v979 = vunpack.c.0.s8 %v978
        %v980 = vlaneseq
        %v981 = vshrl.u32 %v980, 7
        %v982 = vsub.s32 %v979, %v981
        %v983 = vrot.slane %v975, %v982
        %985 = vset.pattern.permute.xlu0 0
        %986 = vperm.xlu0 %985, %v710
        %v987 = vpop.permute.xlu0 %986
        %v990 = vunpack.c.l.s4 839922192
        %v991 = vunpack.c.0.s8 %v990
        %v992 = vlaneseq
        %v993 = vshrl.u32 %v992, 7
        %v994 = vsub.s32 %v991, %v993
        %v995 = vrot.slane %v987, %v994
        %997 = vset.pattern.permute.xlu0 0
        %998 = vperm.xlu0 %997, %v711
        %v999 = vpop.permute.xlu0 %998
        %v1002 = vunpack.c.l.s4 839922192
        %v1003 = vunpack.c.0.s8 %v1002
        %v1004 = vlaneseq
        %v1005 = vshrl.u32 %v1004, 7
        %v1006 = vsub.s32 %v1003, %v1005
        %v1007 = vrot.slane %v999, %v1006
        %1009 = vset.pattern.permute.xlu0 0
        %1010 = vperm.xlu0 %1009, %v712
        %v1011 = vpop.permute.xlu0 %1010
        %v1014 = vunpack.c.l.s4 839922192
        %v1015 = vunpack.c.0.s8 %v1014
        %v1016 = vlaneseq
        %v1017 = vshrl.u32 %v1016, 7
        %v1018 = vsub.s32 %v1015, %v1017
        %v1019 = vrot.slane %v1011, %v1018
        %1021 = vset.pattern.permute.xlu0 0
        %1022 = vperm.xlu0 %1021, %v713
        %v1023 = vpop.permute.xlu0 %1022
        %v1026 = vunpack.c.l.s4 839922192
        %v1027 = vunpack.c.0.s8 %v1026
        %v1028 = vlaneseq
        %v1029 = vshrl.u32 %v1028, 7
        %v1030 = vsub.s32 %v1027, %v1029
        %v1031 = vrot.slane %v1023, %v1030
        %1033 = vset.pattern.permute.xlu0 0
        %1034 = vperm.xlu0 %1033, %v714
        %v1035 = vpop.permute.xlu0 %1034
        %v1038 = vunpack.c.l.s4 839922192
        %v1039 = vunpack.c.0.s8 %v1038
        %v1040 = vlaneseq
        %v1041 = vshrl.u32 %v1040, 7
        %v1042 = vsub.s32 %v1039, %v1041
        %v1043 = vrot.slane %v1035, %v1042
        %1045 = vset.pattern.permute.xlu0 0
        %1046 = vperm.xlu0 %1045, %v715
        %v1047 = vpop.permute.xlu0 %1046
        %v1050 = vunpack.c.l.s4 839922192
        %v1051 = vunpack.c.0.s8 %v1050
        %v1052 = vlaneseq
        %v1053 = vshrl.u32 %v1052, 7
        %v1054 = vsub.s32 %v1051, %v1053
        %v1055 = vrot.slane %v1047, %v1054
        %1057 = vset.pattern.permute.xlu0 0
        %1058 = vperm.xlu0 %1057, %v716
        %v1059 = vpop.permute.xlu0 %1058
        %v1062 = vunpack.c.l.s4 839922192
        %v1063 = vunpack.c.0.s8 %v1062
        %v1064 = vlaneseq
        %v1065 = vshrl.u32 %v1064, 7
        %v1066 = vsub.s32 %v1063, %v1065
        %v1067 = vrot.slane %v1059, %v1066
        %1069 = vset.pattern.permute.xlu0 0
        %1070 = vperm.xlu0 %1069, %v717
        %v1071 = vpop.permute.xlu0 %1070
        %v1074 = vunpack.c.l.s4 839922192
        %v1075 = vunpack.c.0.s8 %v1074
        %v1076 = vlaneseq
        %v1077 = vshrl.u32 %v1076, 7
        %v1078 = vsub.s32 %v1075, %v1077
        %v1079 = vrot.slane %v1071, %v1078
        %1081 = vset.pattern.permute.xlu0 0
        %1082 = vperm.xlu0 %1081, %v718
        %v1083 = vpop.permute.xlu0 %1082
        %v1086 = vunpack.c.l.s4 839922192
        %v1087 = vunpack.c.0.s8 %v1086
        %v1088 = vlaneseq
        %v1089 = vshrl.u32 %v1088, 7
        %v1090 = vsub.s32 %v1087, %v1089
        %v1091 = vrot.slane %v1083, %v1090
        %1093 = vset.pattern.permute.xlu0 0
        %1094 = vperm.xlu0 %1093, %v719
        %v1095 = vpop.permute.xlu0 %1094
        %v1098 = vunpack.c.l.s4 839922192
        %v1099 = vunpack.c.0.s8 %v1098
        %v1100 = vlaneseq
        %v1101 = vshrl.u32 %v1100, 7
        %v1102 = vsub.s32 %v1099, %v1101
        %v1103 = vrot.slane %v1095, %v1102
        %v1136 = vunpack.c.l.b16 %v731
        %v1137 = vunpack.c.l.b16 %v743
        %v1138 = vunpack.c.l.b16 %v755
        %v1139 = vunpack.c.l.b16 %v767
        %v1140 = vunpack.c.l.b16 %v779
        %v1141 = vunpack.c.l.b16 %v791
        %v1142 = vunpack.c.l.b16 %v803
        %v1143 = vunpack.c.l.b16 %v815
        %v1144 = vunpack.c.l.b16 %v827
        %v1145 = vunpack.c.l.b16 %v839
        %v1146 = vunpack.c.l.b16 %v851
        %v1147 = vunpack.c.l.b16 %v863
        %v1148 = vunpack.c.l.b16 %v875
        %v1149 = vunpack.c.l.b16 %v887
        %v1150 = vunpack.c.l.b16 %v899
        %v1151 = vunpack.c.l.b16 %v911
        %v1152 = vunpack.c.l.b16 %v923
        %v1153 = vunpack.c.l.b16 %v935
        %v1154 = vunpack.c.l.b16 %v947
        %v1155 = vunpack.c.l.b16 %v959
        %v1156 = vunpack.c.l.b16 %v971
        %v1157 = vunpack.c.l.b16 %v983
        %v1158 = vunpack.c.l.b16 %v995
        %v1159 = vunpack.c.l.b16 %v1007
        %v1160 = vunpack.c.l.b16 %v1019
        %v1161 = vunpack.c.l.b16 %v1031
        %v1162 = vunpack.c.l.b16 %v1043
        %v1163 = vunpack.c.l.b16 %v1055
        %v1164 = vunpack.c.l.b16 %v1067
        %v1165 = vunpack.c.l.b16 %v1079
        %v1166 = vunpack.c.l.b16 %v1091
        %v1167 = vunpack.c.l.b16 %v1103
        %v1168 = vpack.c.b16 %v1137, %v1136
        %v1169 = vpack.c.b16 %v1139, %v1138
        %v1170 = vpack.c.b16 %v1141, %v1140
        %v1171 = vpack.c.b16 %v1143, %v1142
        %v1172 = vpack.c.b16 %v1145, %v1144
        %v1173 = vpack.c.b16 %v1147, %v1146
        %v1174 = vpack.c.b16 %v1149, %v1148
        %v1175 = vpack.c.b16 %v1151, %v1150
        %v1176 = vpack.c.b16 %v1153, %v1152
        %v1177 = vpack.c.b16 %v1155, %v1154
        %v1178 = vpack.c.b16 %v1157, %v1156
        %v1179 = vpack.c.b16 %v1159, %v1158
        %v1180 = vpack.c.b16 %v1161, %v1160
        %v1181 = vpack.c.b16 %v1163, %v1162
        %v1182 = vpack.c.b16 %v1165, %v1164
        %v1183 = vpack.c.b16 %v1167, %v1166
        %v1200 = vadd.bf16 %v672, %v1168
        %v1201 = vadd.bf16 %v673, %v1169
        %v1202 = vadd.bf16 %v674, %v1170
        %v1203 = vadd.bf16 %v675, %v1171
        %v1204 = vadd.bf16 %v676, %v1172
        %v1205 = vadd.bf16 %v677, %v1173
        %v1206 = vadd.bf16 %v678, %v1174
        %v1207 = vadd.bf16 %v679, %v1175
        %v1208 = vadd.bf16 %v680, %v1176
        %v1209 = vadd.bf16 %v681, %v1177
        %v1210 = vadd.bf16 %v682, %v1178
        %v1211 = vadd.bf16 %v683, %v1179
        %v1212 = vadd.bf16 %v684, %v1180
        %v1213 = vadd.bf16 %v685, %v1181
        %v1214 = vadd.bf16 %v686, %v1182
        %v1215 = vadd.bf16 %v687, %v1183
        %v1216 = vmax.bf16 %v1200, 0
        %v1217 = vmax.bf16 %v1201, 0
        %v1218 = vmax.bf16 %v1202, 0
        %v1219 = vmax.bf16 %v1203, 0
        %v1220 = vmax.bf16 %v1204, 0
        %v1221 = vmax.bf16 %v1205, 0
        %v1222 = vmax.bf16 %v1206, 0
        %v1223 = vmax.bf16 %v1207, 0
        %v1224 = vmax.bf16 %v1208, 0
        %v1225 = vmax.bf16 %v1209, 0
        %v1226 = vmax.bf16 %v1210, 0
        %v1227 = vmax.bf16 %v1211, 0
        %v1228 = vmax.bf16 %v1212, 0
        %v1229 = vmax.bf16 %v1213, 0
        %v1230 = vmax.bf16 %v1214, 0
        %v1231 = vmax.bf16 %v1215, 0
        %v1232 = vld [vmem:[%s3] sm:$0xff]
        %v1233 = vld [vmem:[%s3 + $0x8] sm:$0xff]
        %v1234 = vld [vmem:[%s3 + $0x10] sm:$0xff]
        %v1235 = vld [vmem:[%s3 + $0x18] sm:$0xff]
        %v1236 = vld [vmem:[%s3 + $0x20] sm:$0xff]
        %v1237 = vld [vmem:[%s3 + $0x28] sm:$0xff]
        %v1238 = vld [vmem:[%s3 + $0x30] sm:$0xff]
        %v1239 = vld [vmem:[%s3 + $0x38] sm:$0xff]
        %v1240 = vld [vmem:[%s4] sm:$0xff]
        %v1241 = vld [vmem:[%s4 + $0x8] sm:$0xff]
        %v1242 = vld [vmem:[%s4 + $0x10] sm:$0xff]
        %v1243 = vld [vmem:[%s4 + $0x18] sm:$0xff]
        %v1244 = vld [vmem:[%s4 + $0x20] sm:$0xff]
        %v1245 = vld [vmem:[%s4 + $0x28] sm:$0xff]
        %v1246 = vld [vmem:[%s4 + $0x30] sm:$0xff]
        %v1247 = vld [vmem:[%s4 + $0x38] sm:$0xff]
        %1249 = vset.pattern.permute.xlu0 0
        %1250 = vperm.xlu0 %1249, %v1240
        %v1251 = vpop.permute.xlu0 %1250
        %1254 = vset.pattern.permute.xlu0 0
        %1255 = vperm.xlu0 %1254, %v1241
        %v1256 = vpop.permute.xlu0 %1255
        %1259 = vset.pattern.permute.xlu0 0
        %1260 = vperm.xlu0 %1259, %v1242
        %v1261 = vpop.permute.xlu0 %1260
        %1264 = vset.pattern.permute.xlu0 0
        %1265 = vperm.xlu0 %1264, %v1243
        %v1266 = vpop.permute.xlu0 %1265
        %1269 = vset.pattern.permute.xlu0 0
        %1270 = vperm.xlu0 %1269, %v1244
        %v1271 = vpop.permute.xlu0 %1270
        %1274 = vset.pattern.permute.xlu0 0
        %1275 = vperm.xlu0 %1274, %v1245
        %v1276 = vpop.permute.xlu0 %1275
        %1279 = vset.pattern.permute.xlu0 0
        %1280 = vperm.xlu0 %1279, %v1246
        %v1281 = vpop.permute.xlu0 %1280
        %1284 = vset.pattern.permute.xlu0 0
        %1285 = vperm.xlu0 %1284, %v1247
        %v1286 = vpop.permute.xlu0 %1285
        %v1296 = vunpack.c.l.b16 %v1232
        %v1297 = vunpack.c.h.b16 %v1232
        %v1298 = vunpack.c.l.b16 %v1233
        %v1299 = vunpack.c.h.b16 %v1233
        %v1300 = vunpack.c.l.b16 %v1234
        %v1301 = vunpack.c.h.b16 %v1234
        %v1302 = vunpack.c.l.b16 %v1235
        %v1303 = vunpack.c.h.b16 %v1235
        %v1304 = vunpack.c.l.b16 %v1236
        %v1305 = vunpack.c.h.b16 %v1236
        %v1306 = vunpack.c.l.b16 %v1237
        %v1307 = vunpack.c.h.b16 %v1237
        %v1308 = vunpack.c.l.b16 %v1238
        %v1309 = vunpack.c.h.b16 %v1238
        %v1310 = vunpack.c.l.b16 %v1239
        %v1311 = vunpack.c.h.b16 %v1239
        %v1312 = vpack.c.b16 %v1298, %v1296
        %v1313 = vpack.c.b16 %v1299, %v1297
        %v1314 = vpack.c.b16 %v1302, %v1300
        %v1315 = vpack.c.b16 %v1303, %v1301
        %v1316 = vpack.c.b16 %v1306, %v1304
        %v1317 = vpack.c.b16 %v1307, %v1305
        %v1318 = vpack.c.b16 %v1310, %v1308
        %v1319 = vpack.c.b16 %v1311, %v1309
        %1328 = vmatprep.subr.bf16.mxu0 0
        %1329 = vmatpush1.bf16.msra.mxu0 %v1223
        %1330 = vmatprep.subr.bf16.mxu0 0
        %1331 = vmatpush1.bf16.msra.mxu0 %v1222
        %1332 = vmatprep.subr.bf16.mxu0 0
        %1333 = vmatpush1.bf16.msra.mxu0 %v1221
        %1334 = vmatprep.subr.bf16.mxu0 0
        %1335 = vmatpush1.bf16.msra.mxu0 %v1220
        %1336 = vmatprep.subr.bf16.mxu0 0
        %1337 = vmatpush1.bf16.msra.mxu0 %v1219
        %1338 = vmatprep.subr.bf16.mxu0 0
        %1339 = vmatpush1.bf16.msra.mxu0 %v1218
        %1340 = vmatprep.subr.bf16.mxu0 0
        %1341 = vmatpush1.bf16.msra.mxu0 %v1217
        %1342 = vmatprep.subr.bf16.mxu0 0
        %1343 = vmatpush1.bf16.msra.mxu0 %v1216
        %1344 = vmatprep.subr.bf16.mxu0 0
        %1345 = vmatpush2.bf16.msra.mxu0 %v1231
        %1346 = vmatprep.subr.bf16.mxu0 0
        %1347 = vmatpush2.bf16.msra.mxu0 %v1230
        %1348 = vmatprep.subr.bf16.mxu0 0
        %1349 = vmatpush2.bf16.msra.mxu0 %v1229
        %1350 = vmatprep.subr.bf16.mxu0 0
        %1351 = vmatpush2.bf16.msra.mxu0 %v1228
        %1352 = vmatprep.subr.bf16.mxu0 0
        %1353 = vmatpush2.bf16.msra.mxu0 %v1227
        %1354 = vmatprep.subr.bf16.mxu0 0
        %1355 = vmatpush2.bf16.msra.mxu0 %v1226
        %1356 = vmatprep.subr.bf16.mxu0 0
        %1357 = vmatpush2.bf16.msra.mxu0 %v1225
        %1358 = vmatprep.subr.bf16.mxu0 0
        %1359 = vmatpush2.bf16.msra.mxu0 %v1224
        %1360 = vmatprep.mubr.bf16.mxu0 %v1313
        %1361 = vmatmul.mubr.bf16.gmra.mxu0 %v1312
        %v1362 = vpop.f32.mrf.mxu0
        %v1363 = vadd.f32 %v1251, %v1362
        %v1364 = vpop.f32.mrf.mxu0
        %v1365 = vpop.f32.mrf.mxu0
        %v1366 = vadd.f32 %v1256, %v1365
        %v1367 = vpop.f32.mrf.mxu0
        %1368 = vmatprep.mubr.bf16.mxu0 %v1315
        %1369 = vmatmul.mubr.bf16.gmra.mxu0 %v1314
        %v1370 = vpop.f32.mrf.mxu0
        %v1371 = vadd.f32 %v1261, %v1370
        %v1372 = vpop.f32.mrf.mxu0
        %v1373 = vpop.f32.mrf.mxu0
        %v1374 = vadd.f32 %v1266, %v1373
        %v1375 = vpop.f32.mrf.mxu0
        %1376 = vmatprep.mubr.bf16.mxu0 %v1317
        %1377 = vmatmul.mubr.bf16.gmra.mxu0 %v1316
        %v1378 = vpop.f32.mrf.mxu0
        %v1379 = vadd.f32 %v1271, %v1378
        %v1380 = vpop.f32.mrf.mxu0
        %v1381 = vpop.f32.mrf.mxu0
        %v1382 = vadd.f32 %v1276, %v1381
        %v1383 = vpop.f32.mrf.mxu0
        %1384 = vmatprep.mubr.bf16.mxu0 %v1319
        %1385 = vmatmul.mubr.bf16.gmra.mxu0 %v1318
        %v1386 = vpop.f32.mrf.mxu0
        %v1387 = vadd.f32 %v1281, %v1386
        %v1388 = vpop.f32.mrf.mxu0
        %v1389 = vpop.f32.mrf.mxu0
        %v1390 = vadd.f32 %v1286, %v1389
        %v1391 = vpop.f32.mrf.mxu0
        %1392 = vdwg.mxu0
        %v1393 = vmax.f32 %v1363, 0.0
        %v1394 = vmax.f32 %v1366, 0.0
        %v1395 = vmax.f32 %v1371, 0.0
        %v1396 = vmax.f32 %v1374, 0.0
        %v1397 = vmax.f32 %v1379, 0.0
        %v1398 = vmax.f32 %v1382, 0.0
        %v1399 = vmax.f32 %v1387, 0.0
        %v1400 = vmax.f32 %v1390, 0.0
        %v1401 = vld [vmem:[%s5] sm:$0xff]
        %v1402 = vld [vmem:[%s5 + $0x8] sm:$0xff]
        %v1403 = vld [vmem:[%s5 + $0x10] sm:$0xff]
        %v1404 = vld [vmem:[%s5 + $0x18] sm:$0xff]
        %v1405 = vld [vmem:[%s5 + $0x20] sm:$0xff]
        %v1406 = vld [vmem:[%s5 + $0x28] sm:$0xff]
        %v1407 = vld [vmem:[%s5 + $0x30] sm:$0xff]
        %v1408 = vld [vmem:[%s5 + $0x38] sm:$0xff]
        %1410 = vset.pattern.permute.xlu0 0
        %1411 = vperm.xlu0 %1410, %v1401
        %v1412 = vpop.permute.xlu0 %1411
        %1415 = vset.pattern.permute.xlu0 0
        %1416 = vperm.xlu0 %1415, %v1402
        %v1417 = vpop.permute.xlu0 %1416
        %1420 = vset.pattern.permute.xlu0 0
        %1421 = vperm.xlu0 %1420, %v1403
        %v1422 = vpop.permute.xlu0 %1421
        %1425 = vset.pattern.permute.xlu0 0
        %1426 = vperm.xlu0 %1425, %v1404
        %v1427 = vpop.permute.xlu0 %1426
        %1430 = vset.pattern.permute.xlu0 0
        %1431 = vperm.xlu0 %1430, %v1405
        %v1432 = vpop.permute.xlu0 %1431
        %1435 = vset.pattern.permute.xlu0 0
        %1436 = vperm.xlu0 %1435, %v1406
        %v1437 = vpop.permute.xlu0 %1436
        %1440 = vset.pattern.permute.xlu0 0
        %1441 = vperm.xlu0 %1440, %v1407
        %v1442 = vpop.permute.xlu0 %1441
        %1445 = vset.pattern.permute.xlu0 0
        %1446 = vperm.xlu0 %1445, %v1408
        %v1447 = vpop.permute.xlu0 %1446
        %v1449 = vmul.f32 %v1393, %v1412
        %v1450 = vmul.f32 %v1394, %v1417
        %v1451 = vmul.f32 %v1395, %v1422
        %v1452 = vmul.f32 %v1396, %v1427
        %v1453 = vmul.f32 %v1397, %v1432
        %v1454 = vmul.f32 %v1398, %v1437
        %v1455 = vmul.f32 %v1399, %v1442
        %v1456 = vmul.f32 %v1400, %v1447
        %v1457 = vadd.f32 %v1449, %v1450
        %v1458 = vadd.f32 %v1457, %v1451
        %v1459 = vadd.f32 %v1458, %v1452
        %v1460 = vadd.f32 %v1459, %v1453
        %v1461 = vadd.f32 %v1460, %v1454
        %v1462 = vadd.f32 %v1461, %v1455
        %v1463 = vadd.f32 %v1462, %v1456
        %v1464 = vrot.slane %v1463, 4
        %v1465 = vadd.f32 %v1463, %v1464
        %v1466 = vrot.slane %v1465, 2
        %v1467 = vadd.f32 %v1465, %v1466
        %v1468 = vrot.slane %v1467, 1
        %v1469 = vadd.f32 %v1467, %v1468
        %v1470 = vld [vmem:[#allocation2] sm:$0x1]
        %1472 = vset.pattern.permute.xlu0 0
        %1473 = vperm.xlu0 %1472, %v1470
        %v1474 = vpop.permute.xlu0 %1473
        %v1476 = vlaneseq
        %v1477 = vshrl.u32 %v1476, 7
        %v1478 = vsub.s32 0, %v1477
        %v1479 = vrot.slane %v1474, %v1478
        %v1480 = vadd.f32 %v1469, %v1479
        %1481 = vst [vmem:[%s332] sm:$0x1] %v1480
        %s1482 = sand.u32 %s183, 1
        %s1483 = scalar_lea.sflag [#allocation5], %s1482
        %s1484 = sand.u32 %s183, 1
        %s1485 = scalar_lea.vmem [#allocation4], %s1484
        // Predicated region
        $region90: #{tpu_custom_call.1} parent=84 // pred_check
          %p1486 = pneg %p193
        $region91: #{tpu_custom_call.1} parent=84 // pred_check_branch
          %1488 = sbr.rel (%p1486) target = $region93
        $region92: #{tpu_custom_call.1} parent=84 // pred_region
          %s1490 = ssub.s32 16, 16
          %1491 = vsyncadd %s1483, %s1490
          %s1492 = smul.addr %s23, 16
          %s1493 = scalar_lea.hbm %s7, %s1492
          %s1495 = sshll.u32 %s1485, 4
          %s1496 = int_to_ptr.vmem [resolvable:$true] %s1495
          %1498 = dma.vmem_to_hbm [thread:$0]  %s1496, 16, %s1493, %s1483
        $region93: #{tpu_custom_call.1} parent=84 // pred_fallthru
          _
      $region85: #{tpu_custom_call.1} parent=5 // pred_fallthru
        _
      %p1499 = scmp.le.s32.totalorder 2, %s18
      // Predicated region
      $region94: #{tpu_custom_call.1} parent=5 // pred_check
        %p1500 = pneg %p1499
      $region95: #{tpu_custom_call.1} parent=5 // pred_check_branch
        %1502 = sbr.rel (%p1500) target = $region97
      $region96: #{tpu_custom_call.1} parent=5 // pred_region
        %s1503 = ssub.s32 %s18, 2
        // Predicated region
        $region98: #{tpu_custom_call.1} parent=96 // pred_check
          %p1504 = pneg %p199
        $region99: #{tpu_custom_call.1} parent=96 // pred_check_branch
          %1506 = sbr.rel (%p1504) target = $region101
        $region100: #{tpu_custom_call.1} parent=96 // pred_region
          %s1507 = sand.u32 %s184, 1
          %s1508 = scalar_lea.sflag [#allocation5], %s1507
          %s1509 = sand.u32 %s184, 1
          %s1510 = scalar_lea.vmem [#allocation4], %s1509
          %1511 = dma.done %s1508, 16
        $region101: #{tpu_custom_call.1} parent=96 // pred_fallthru
          _
      $region97: #{tpu_custom_call.1} parent=5 // pred_fallthru
        _
    $region6: #{tpu_custom_call.1} parent=1 // loop_footer
      %s22 = sadd.s32 1, %s18
    $region7: #{tpu_custom_call.1} parent=1 // loop_footer_branch
      %17 = sbr.rel target = $region3
    $region8: #{tpu_custom_call.1} parent=1 // loop_exit
      _
    %1512 = vsyncpa [#allocation5], 1
    %s1513 = scalar_lea.sflag [#allocation5], 1
    %1514 = vsyncpa %s1513, 1

</llo_original>
